<compile_context>
chip_gen: v5e
topology: v5e:2x2
jax: 0.10.0
libtpu: 0.0.40
codegen_flags: <defaults>
</compile_context>

<pallas_src>
import jax
import jax.numpy as jnp
from jax.experimental import pallas as pl
from jax.experimental.pallas import tpu as pltpu


def _round_up(x, m):
    return ((x + m - 1) // m) * m


def net_kernel(x_ref, w1_ref, b1_ref, w2_ref, b2_ref, out_ref):
    # Fused layer 1: one wide matmul + one tanh over [TB, 2*H].
    h = jnp.tanh(
        jnp.dot(x_ref[...], w1_ref[...], preferred_element_type=jnp.float32)
        + b1_ref[...]
    )
    # Fused layer 2 (block-diagonal weights) -> single lane-dense [TB, 128] slab.
    out_ref[...] = (
        jnp.dot(h, w2_ref[...], preferred_element_type=jnp.float32) + b2_ref[...]
    )


def _pack_params(params, a_dim):
    """Fuse actor/critic weights: W1=[s_dim,2H], b1=[1,2H], block-diag W2=[2H,OUT_W]."""
    wp1, bp1, wp2, bp2, wv1, bv1, wv2, bv2 = params
    hidden = wp1.shape[1]

    w1 = jnp.concatenate([wp1, wv1], axis=1)  # [s_dim, 2H]
    b1 = jnp.concatenate([bp1, bv1], axis=1)  # [1, 2H]

    out_w = max(128, _round_up(a_dim + 1, 128))  # lane-dense padded output width
    w2 = jnp.zeros((2 * hidden, out_w), jnp.float32)
    w2 = w2.at[:hidden, :a_dim].set(wp2)                  # pi half -> logits cols
    w2 = w2.at[hidden:, a_dim:a_dim + 1].set(wv2)         # v half  -> value col
    b2 = jnp.zeros((1, out_w), jnp.float32)
    b2 = b2.at[:, :a_dim].set(bp2)
    b2 = b2.at[:, a_dim:a_dim + 1].set(bv2)
    return w1, b1, w2, b2, out_w


def net_forward(x, params, tb=512):
    """Pallas forward of Net: returns (logits [B, a_dim], values [B, 1])."""
    B, s_dim = x.shape
    a_dim = params[2].shape[1]
    w1, b1, w2, b2, out_w = _pack_params(params, a_dim)
    h2 = w1.shape[1]  # 2*hidden

    # Batch tile: multiple of 8 sublanes, capped at `tb`; pad B so it divides.
    TB = min(tb, _round_up(B, 8))
    Bp = _round_up(B, TB)
    if Bp != B:
        x = jnp.pad(x, ((0, Bp - B), (0, 0)))

    out = pl.pallas_call(
        net_kernel,
        out_shape=jax.ShapeDtypeStruct((Bp, out_w), jnp.float32),
        grid=(Bp // TB,),
        in_specs=[
            pl.BlockSpec((TB, s_dim), lambda i: (i, 0)),     # x: tiled on batch
            pl.BlockSpec((s_dim, h2), lambda i: (0, 0)),     # W1: resident
            pl.BlockSpec((1, h2), lambda i: (0, 0)),         # b1: resident
            pl.BlockSpec((h2, out_w), lambda i: (0, 0)),     # W2: resident
            pl.BlockSpec((1, out_w), lambda i: (0, 0)),      # b2: resident
        ],
        out_specs=pl.BlockSpec((TB, out_w), lambda i: (i, 0)),
        compiler_params=pltpu.CompilerParams(
            dimension_semantics=("parallel",)
        ),
    )(x, w1, b1, w2, b2)

    out = out[:B]
    logits = out[:, :a_dim]
    values = out[:, a_dim:a_dim + 1]
    return logits, values


def init_params(key, s_dim, a_dim, hidden=128):
    """Deterministic init mimicking set_init (normal(0, 0.1) weights, zero bias)."""
    ks = jax.random.split(key, 4)
    # Stored directly in [in, out] layout (transpose of PyTorch's [out, in]).
    wp1 = 0.1 * jax.random.normal(ks[0], (s_dim, hidden), jnp.float32)
    bp1 = jnp.zeros((1, hidden), jnp.float32)
    wp2 = 0.1 * jax.random.normal(ks[1], (hidden, a_dim), jnp.float32)
    bp2 = jnp.zeros((1, a_dim), jnp.float32)
    wv1 = 0.1 * jax.random.normal(ks[2], (s_dim, hidden), jnp.float32)
    bv1 = jnp.zeros((1, hidden), jnp.float32)
    wv2 = 0.1 * jax.random.normal(ks[3], (hidden, 1), jnp.float32)
    bv2 = jnp.zeros((1, 1), jnp.float32)
    return (wp1, bp1, wp2, bp2, wv1, bv1, wv2, bv2)


def net_forward_ref(x, params):
    wp1, bp1, wp2, bp2, wv1, bv1, wv2, bv2 = params
    pi1 = jnp.tanh(x @ wp1 + bp1)
    logits = pi1 @ wp2 + bp2
    v1 = jnp.tanh(x @ wv1 + bv1)
    values = v1 @ wv2 + bv2
    return logits, values


if __name__ == "__main__":
    key = jax.random.PRNGKey(0)
    k_x, k_p = jax.random.split(key)

    B, S_DIM, A_DIM = 8, 16, 6  # small shapes consistent with Net(s_dim, a_dim)
    x = jax.random.normal(k_x, (B, S_DIM), jnp.float32)
    params = init_params(k_p, S_DIM, A_DIM)

    logits, values = net_forward(x, params)
    logits = jax.block_until_ready(logits)
    values = jax.block_until_ready(values)

    ref_logits, ref_values = net_forward_ref(x, params)
    assert logits.shape == (B, A_DIM) and values.shape == (B, 1)
    assert jnp.allclose(logits, ref_logits, atol=1e-5, rtol=1e-5)
    assert jnp.allclose(values, ref_values, atol=1e-5, rtol=1e-5)

    # Also exercise a batch that needs padding / multiple grid steps.
    B2 = 1000
    x2 = jax.random.normal(jax.random.PRNGKey(2), (B2, S_DIM), jnp.float32)
    l2, v2 = net_forward(x2, params, tb=512)
    l2 = jax.block_until_ready(l2)
    rl2, rv2 = net_forward_ref(x2, params)
    assert l2.shape == (B2, A_DIM) and v2.shape == (B2, 1)
    assert jnp.allclose(l2, rl2, atol=1e-5, rtol=1e-5)
    assert jnp.allclose(v2, rv2, atol=1e-5, rtol=1e-5)

    print("KERNEL_OK")
</pallas_src>

<mosaic_0001>
module attributes {stable_mosaic.version = 11 : i64} {
  func.func @net_kernel(%arg0: i32, %arg1: memref<8x16xf32, #tpu.memory_space<vmem>>, %arg2: memref<16x256xf32, #tpu.memory_space<vmem>>, %arg3: memref<1x256xf32, #tpu.memory_space<vmem>>, %arg4: memref<256x128xf32, #tpu.memory_space<vmem>>, %arg5: memref<1x128xf32, #tpu.memory_space<vmem>>, %arg6: memref<8x128xf32, #tpu.memory_space<vmem>>) attributes {dimension_semantics = [#tpu.dimension_semantics<parallel>], iteration_bounds = array<i64: 1>, scalar_prefetch = 0 : i64, scratch_operands = 0 : i64, tpu.core_type = #tpu.core_type<tc>, window_params = [{transform_indices = @transform_0, window_bounds = array<i64: 8, 16>}, {pipeline_mode = #tpu.pipeline_mode<synchronous>, transform_indices = @transform_1, window_bounds = array<i64: 16, 256>}, {pipeline_mode = #tpu.pipeline_mode<synchronous>, transform_indices = @transform_2, window_bounds = array<i64: 1, 256>}, {pipeline_mode = #tpu.pipeline_mode<synchronous>, transform_indices = @transform_3, window_bounds = array<i64: 256, 128>}, {pipeline_mode = #tpu.pipeline_mode<synchronous>, transform_indices = @transform_4, window_bounds = array<i64: 1, 128>}, {transform_indices = @transform_5, window_bounds = array<i64: 8, 128>}]} {
    %c0 = arith.constant 0 : index
    %c0_0 = arith.constant 0 : index
    %0 = vector.load %arg1[%c0, %c0_0] : memref<8x16xf32, #tpu.memory_space<vmem>>, vector<8x16xf32>
    %c0_1 = arith.constant 0 : index
    %c0_2 = arith.constant 0 : index
    %1 = vector.load %arg2[%c0_1, %c0_2] : memref<16x256xf32, #tpu.memory_space<vmem>>, vector<16x256xf32>
    %cst = arith.constant dense<0.000000e+00> : vector<8x256xf32>
    %2 = tpu.matmul %0, %1, %cst {dimension_numbers = #tpu.dot_dimension_numbers<[1], [0], [0], [1], [0, 0, 1, 1], [], []>} : vector<8x16xf32>, vector<16x256xf32>, vector<8x256xf32> -> vector<8x256xf32>
    %c0_3 = arith.constant 0 : index
    %c0_4 = arith.constant 0 : index
    %3 = vector.load %arg3[%c0_3, %c0_4] : memref<1x256xf32, #tpu.memory_space<vmem>>, vector<1x256xf32>
    %4 = vector.broadcast %3 : vector<1x256xf32> to vector<8x256xf32>
    %5 = arith.addf %2, %4 : vector<8x256xf32>
    %6 = math.tanh %5 : vector<8x256xf32>
    %c0_5 = arith.constant 0 : index
    %c0_6 = arith.constant 0 : index
    %7 = vector.load %arg4[%c0_5, %c0_6] : memref<256x128xf32, #tpu.memory_space<vmem>>, vector<256x128xf32>
    %cst_7 = arith.constant dense<0.000000e+00> : vector<8x128xf32>
    %8 = tpu.matmul %6, %7, %cst_7 {dimension_numbers = #tpu.dot_dimension_numbers<[1], [0], [0], [1], [0, 0, 1, 1], [], []>} : vector<8x256xf32>, vector<256x128xf32>, vector<8x128xf32> -> vector<8x128xf32>
    %c0_8 = arith.constant 0 : index
    %c0_9 = arith.constant 0 : index
    %9 = vector.load %arg5[%c0_8, %c0_9] : memref<1x128xf32, #tpu.memory_space<vmem>>, vector<1x128xf32>
    %10 = vector.broadcast %9 : vector<1x128xf32> to vector<8x128xf32>
    %11 = arith.addf %8, %10 : vector<8x128xf32>
    %c0_10 = arith.constant 0 : index
    %c0_11 = arith.constant 0 : index
    %12 = vector.load %arg6[%c0_10, %c0_11] : memref<8x128xf32, #tpu.memory_space<vmem>>, vector<8x128xf32>
    tpu.vector_store %arg6[%c0_10, %c0_11], %11 {strides = array<i32>} : memref<8x128xf32, #tpu.memory_space<vmem>>, vector<8x128xf32>,
    return
  }
  func.func @transform_0(%arg0: i32) -> (i32, i32) {
    %c0_i32 = arith.constant 0 : i32
    %c0_i32_0 = arith.constant 0 : i32
    return %arg0, %c0_i32 : i32, i32
  }
  func.func @transform_1(%arg0: i32) -> (i32, i32) {
    %c0_i32 = arith.constant 0 : i32
    %c0_i32_0 = arith.constant 0 : i32
    %c0_i32_1 = arith.constant 0 : i32
    return %c0_i32, %c0_i32_0 : i32, i32
  }
  func.func @transform_2(%arg0: i32) -> (i32, i32) {
    %c0_i32 = arith.constant 0 : i32
    %c0_i32_0 = arith.constant 0 : i32
    %c0_i32_1 = arith.constant 0 : i32
    return %c0_i32, %c0_i32_0 : i32, i32
  }
  func.func @transform_3(%arg0: i32) -> (i32, i32) {
    %c0_i32 = arith.constant 0 : i32
    %c0_i32_0 = arith.constant 0 : i32
    %c0_i32_1 = arith.constant 0 : i32
    return %c0_i32, %c0_i32_0 : i32, i32
  }
  func.func @transform_4(%arg0: i32) -> (i32, i32) {
    %c0_i32 = arith.constant 0 : i32
    %c0_i32_0 = arith.constant 0 : i32
    %c0_i32_1 = arith.constant 0 : i32
    return %c0_i32, %c0_i32_0 : i32, i32
  }
  func.func @transform_5(%arg0: i32) -> (i32, i32) {
    %c0_i32 = arith.constant 0 : i32
    %c0_i32_0 = arith.constant 0 : i32
    return %arg0, %c0_i32 : i32, i32
  }
}

</mosaic_0001>

<llo_original>
// kernel: tpu_custom_call.1
$region0: #{tpu_custom_call.1}
  #allocation0 [shape = 'u32[]', space=smem, size = 0x4, offset = 0x4, fixed_abs, tag = 'smem constant byte address 0x4 - core index']
  #allocation1 [shape = 'u32[72,128]{1,0:T(1,128)}', space=vmem, size = 0x9000, scoped, tag = 'internal scratch']
  %s0 = inlined_call_operand.hbm [shape: f32[8,16], index: 0, kind: input, shape index: {}]
  %s1 = inlined_call_operand.hbm [shape: f32[16,256], index: 1, kind: input, shape index: {}]
  %s2 = inlined_call_operand.hbm [shape: f32[1,256], index: 2, kind: input, shape index: {}]
  %s3 = inlined_call_operand.hbm [shape: f32[256,128], index: 3, kind: input, shape index: {}]
  %s4 = inlined_call_operand.vmem [shape: f32[1,128], index: 4, kind: input, shape index: {}]
  %s5 = inlined_call_operand.hbm [shape: f32[8,128], index: 5, kind: output, shape index: {}]
  %s6 = sld [smem:[#allocation0]]
  $region46: #{tpu_custom_call.1} parent=0
    _
  %s8 = ssub.s32 1, %s6
  %s9 = scalar_select 0, %s8, %s6
  $region1: #{tpu_custom_call.1} parent=0
    #allocation2 [shape = 'u8[4096]{0}', space=vmem, size = 0x1000, scoped, tag = 'input window, operand 0, single buffered']
    #allocation3 [shape = 's32[1]{0}', space=sflag, size = 0x4, scoped, tag = 'scoped memory for tpu_custom_call.1']
    #allocation4 [shape = 's32[1]{0}', space=sflag, size = 0x4, scoped, tag = 'scoped memory for tpu_custom_call.1']
    #allocation5 [shape = 'u8[16384]{0}', space=vmem, size = 0x4000, scoped, tag = 'input window, operand 1, single buffered']
    #allocation6 [shape = 's32[1]{0}', space=sflag, size = 0x4, scoped, tag = 'scoped memory for tpu_custom_call.1']
    #allocation7 [shape = 'u8[1024]{0}', space=vmem, size = 0x400, scoped, tag = 'input window, operand 2, single buffered']
    #allocation8 [shape = 'u8[131072]{0}', space=vmem, size = 0x20000, scoped, tag = 'input window, operand 3, single buffered']
    #allocation9 [shape = 's32[1]{0}', space=sflag, size = 0x4, scoped, tag = 'scoped memory for tpu_custom_call.1']
    #allocation10 [shape = 'u8[4096]{0}', space=vmem, size = 0x1000, scoped, tag = 'output window, operand 0, single buffered']
    %10 = vsyncpa [#allocation3], 0
    %11 = vsyncpa [#allocation6], 0
    %12 = vsyncpa [#allocation9], 0
    %13 = vsyncpa [#allocation4], 0
    // Predicated region
    $region2: #{tpu_custom_call.1} parent=1 // pred_check
      _
    $region3: #{tpu_custom_call.1} parent=1 // pred_check_branch
      %15 = sbr.rel (0) target = $region5
    $region4: #{tpu_custom_call.1} parent=1 // pred_region
      %17 = vsyncadd [#allocation3], 0
      %s19 = sshll.u32 %s0, 4
      %s20 = int_to_ptr.hbm [resolvable:$true] %s19
      %s21 = sshll.u32 [#allocation2], 4
      %s22 = int_to_ptr.vmem [resolvable:$true] %s21
      %24 = dma.hbm_to_vmem [thread:$0]  %s20, 128, %s22, [#allocation3]
    $region5: #{tpu_custom_call.1} parent=1 // pred_fallthru
      _
    // Predicated region
    $region6: #{tpu_custom_call.1} parent=1 // pred_check
      _
    $region7: #{tpu_custom_call.1} parent=1 // pred_check_branch
      %26 = sbr.rel (0) target = $region9
    $region8: #{tpu_custom_call.1} parent=1 // pred_region
      %28 = vsyncadd [#allocation6], 0
      %s29 = sshll.u32 %s1, 4
      %s30 = int_to_ptr.hbm [resolvable:$true] %s29
      %s31 = sshll.u32 [#allocation5], 4
      %s32 = int_to_ptr.vmem [resolvable:$true] %s31
      %37 = dma.hbm_to_vmem [thread:$0]  %s30, 512, %s32, [#allocation6], 256, 256, 16
    $region9: #{tpu_custom_call.1} parent=1 // pred_fallthru
      _
    // Predicated region
    $region10: #{tpu_custom_call.1} parent=1 // pred_check
      _
    $region11: #{tpu_custom_call.1} parent=1 // pred_check_branch
      %39 = sbr.rel (0) target = $region13
    $region12: #{tpu_custom_call.1} parent=1 // pred_region
      %41 = vsyncadd [#allocation6], 0
      %s43 = sshll.u32 %s2, 4
      %s44 = int_to_ptr.hbm [resolvable:$true] %s43
      %s45 = sshll.u32 [#allocation7], 4
      %s46 = int_to_ptr.vmem [resolvable:$true] %s45
      %48 = dma.hbm_to_vmem [thread:$0]  %s44, 32, %s46, [#allocation6]
    $region13: #{tpu_custom_call.1} parent=1 // pred_fallthru
      _
    // Predicated region
    $region14: #{tpu_custom_call.1} parent=1 // pred_check
      _
    $region15: #{tpu_custom_call.1} parent=1 // pred_check_branch
      %50 = sbr.rel (0) target = $region17
    $region16: #{tpu_custom_call.1} parent=1 // pred_region
      %52 = vsyncadd [#allocation9], 0
      %s53 = sshll.u32 %s3, 4
      %s54 = int_to_ptr.hbm [resolvable:$true] %s53
      %s55 = sshll.u32 [#allocation8], 4
      %s56 = int_to_ptr.vmem [resolvable:$true] %s55
      %61 = dma.hbm_to_vmem [thread:$0]  %s54, 4096, %s56, [#allocation9], 128, 128, 8
    $region17: #{tpu_custom_call.1} parent=1 // pred_fallthru
      _
    // Predicated region
    $region18: #{tpu_custom_call.1} parent=1 // pred_check
      _
    $region19: #{tpu_custom_call.1} parent=1 // pred_check_branch
      %63 = sbr.rel (0) target = $region21
    $region20: #{tpu_custom_call.1} parent=1 // pred_region
      _
    $region21: #{tpu_custom_call.1} parent=1 // pred_fallthru
      _
    // Predicated region
    $region22: #{tpu_custom_call.1} parent=1 // pred_check
      _
    $region23: #{tpu_custom_call.1} parent=1 // pred_check_branch
      %65 = sbr.rel (0) target = $region25
    $region24: #{tpu_custom_call.1} parent=1 // pred_region
      %67 = dma.done [#allocation3], 128
    $region25: #{tpu_custom_call.1} parent=1 // pred_fallthru
      _
    // Predicated region
    $region26: #{tpu_custom_call.1} parent=1 // pred_check
      _
    $region27: #{tpu_custom_call.1} parent=1 // pred_check_branch
      %69 = sbr.rel (0) target = $region29
    $region28: #{tpu_custom_call.1} parent=1 // pred_region
      %71 = dma.done [#allocation6], 512
    $region29: #{tpu_custom_call.1} parent=1 // pred_fallthru
      _
    // Predicated region
    $region30: #{tpu_custom_call.1} parent=1 // pred_check
      _
    $region31: #{tpu_custom_call.1} parent=1 // pred_check_branch
      %73 = sbr.rel (0) target = $region33
    $region32: #{tpu_custom_call.1} parent=1 // pred_region
      %75 = dma.done [#allocation6], 32
    $region33: #{tpu_custom_call.1} parent=1 // pred_fallthru
      _
    // Predicated region
    $region34: #{tpu_custom_call.1} parent=1 // pred_check
      _
    $region35: #{tpu_custom_call.1} parent=1 // pred_check_branch
      %77 = sbr.rel (0) target = $region37
    $region36: #{tpu_custom_call.1} parent=1 // pred_region
      %79 = dma.done [#allocation9], 4096
    $region37: #{tpu_custom_call.1} parent=1 // pred_fallthru
      _
    %v80 = vld [vmem:[#allocation2] sm:$0xff]
    %v81 = vld [vmem:[#allocation5] sm:$0xff]
    %v82 = vld [vmem:[#allocation5 + $0x8] sm:$0xff]
    %v83 = vld [vmem:[#allocation5 + $0x10] sm:$0xff]
    %v84 = vld [vmem:[#allocation5 + $0x18] sm:$0xff]
    %v85 = vld [vmem:[#allocation7] sm:$0x3]
    %v87 = vperm.slane %v85, 0
    %v88 = vperm.slane %v85, 1
    %vm91 = vcmask 130048
    %v93 = vsel %vm91, %v80, 0
    %95 = vmatpush.msra.mxu0 0.0
    %96 = vmatpush.msra.mxu0 0.0
    %97 = vmatpush.msra.mxu0 0.0
    %98 = vmatpush.msra.mxu0 0.0
    %99 = vmatpush.msra.mxu0 0.0
    %100 = vmatpush.msra.mxu0 0.0
    %101 = vmatpush.msra.mxu0 0.0
    %102 = vmatpush.msra.mxu0 0.0
    %103 = vmatpush.msra.mxu0 0.0
    %104 = vmatpush.msra.mxu0 0.0
    %105 = vmatpush.msra.mxu0 0.0
    %106 = vmatpush.msra.mxu0 0.0
    %107 = vmatpush.msra.mxu0 0.0
    %108 = vmatpush.msra.mxu0 0.0
    %109 = vmatpush.msra.mxu0 %v83
    %110 = vmatpush.msra.mxu0 %v81
    %111 = vmatmul.f32.gmra.mxu0 %v93
    %v112 = vpop.f32.mrf.mxu0
    %v113 = vadd.f32 %v87, %v112
    %114 = vdwg.mxu0
    %115 = vmatpush.msra.mxu0 0.0
    %116 = vmatpush.msra.mxu0 0.0
    %117 = vmatpush.msra.mxu0 0.0
    %118 = vmatpush.msra.mxu0 0.0
    %119 = vmatpush.msra.mxu0 0.0
    %120 = vmatpush.msra.mxu0 0.0
    %121 = vmatpush.msra.mxu0 0.0
    %122 = vmatpush.msra.mxu0 0.0
    %123 = vmatpush.msra.mxu0 0.0
    %124 = vmatpush.msra.mxu0 0.0
    %125 = vmatpush.msra.mxu0 0.0
    %126 = vmatpush.msra.mxu0 0.0
    %127 = vmatpush.msra.mxu0 0.0
    %128 = vmatpush.msra.mxu0 0.0
    %129 = vmatpush.msra.mxu0 %v84
    %130 = vmatpush.msra.mxu0 %v82
    %131 = vmatmul.f32.gmra.mxu0 %v93
    %v132 = vpop.f32.mrf.mxu0
    %v133 = vadd.f32 %v88, %v132
    %134 = vdwg.mxu0
    %v135 = vtanh.pop %v113
    %v136 = vtanh.pop %v133
    %v137 = vld [vmem:[#allocation8] sm:$0xff]
    %v138 = vld [vmem:[#allocation8 + $0x8] sm:$0xff]
    %v139 = vld [vmem:[#allocation8 + $0x10] sm:$0xff]
    %v140 = vld [vmem:[#allocation8 + $0x18] sm:$0xff]
    %v141 = vld [vmem:[#allocation8 + $0x20] sm:$0xff]
    %v142 = vld [vmem:[#allocation8 + $0x28] sm:$0xff]
    %v143 = vld [vmem:[#allocation8 + $0x30] sm:$0xff]
    %v144 = vld [vmem:[#allocation8 + $0x38] sm:$0xff]
    %v145 = vld [vmem:[#allocation8 + $0x40] sm:$0xff]
    %v146 = vld [vmem:[#allocation8 + $0x48] sm:$0xff]
    %v147 = vld [vmem:[#allocation8 + $0x50] sm:$0xff]
    %v148 = vld [vmem:[#allocation8 + $0x58] sm:$0xff]
    %v149 = vld [vmem:[#allocation8 + $0x60] sm:$0xff]
    %v150 = vld [vmem:[#allocation8 + $0x68] sm:$0xff]
    %v151 = vld [vmem:[#allocation8 + $0x70] sm:$0xff]
    %v152 = vld [vmem:[#allocation8 + $0x78] sm:$0xff]
    %v153 = vld [vmem:[#allocation8 + $0x80] sm:$0xff]
    %v154 = vld [vmem:[#allocation8 + $0x88] sm:$0xff]
    %v155 = vld [vmem:[#allocation8 + $0x90] sm:$0xff]
    %v156 = vld [vmem:[#allocation8 + $0x98] sm:$0xff]
    %v157 = vld [vmem:[#allocation8 + $0xa0] sm:$0xff]
    %v158 = vld [vmem:[#allocation8 + $0xa8] sm:$0xff]
    %v159 = vld [vmem:[#allocation8 + $0xb0] sm:$0xff]
    %v160 = vld [vmem:[#allocation8 + $0xb8] sm:$0xff]
    %v161 = vld [vmem:[#allocation8 + $0xc0] sm:$0xff]
    %v162 = vld [vmem:[#allocation8 + $0xc8] sm:$0xff]
    %v163 = vld [vmem:[#allocation8 + $0xd0] sm:$0xff]
    %v164 = vld [vmem:[#allocation8 + $0xd8] sm:$0xff]
    %v165 = vld [vmem:[#allocation8 + $0xe0] sm:$0xff]
    %v166 = vld [vmem:[#allocation8 + $0xe8] sm:$0xff]
    %v167 = vld [vmem:[#allocation8 + $0xf0] sm:$0xff]
    %v168 = vld [vmem:[#allocation8 + $0xf8] sm:$0xff]
    %v169 = vld [vmem:[%s4] sm:$0x1]
    %v171 = vperm.slane %v169, 0
    %173 = vmatpush.msra.mxu0 %v152
    %174 = vmatpush.msra.mxu0 %v151
    %175 = vmatpush.msra.mxu0 %v150
    %176 = vmatpush.msra.mxu0 %v149
    %177 = vmatpush.msra.mxu0 %v148
    %178 = vmatpush.msra.mxu0 %v147
    %179 = vmatpush.msra.mxu0 %v146
    %180 = vmatpush.msra.mxu0 %v145
    %181 = vmatpush.msra.mxu0 %v144
    %182 = vmatpush.msra.mxu0 %v143
    %183 = vmatpush.msra.mxu0 %v142
    %184 = vmatpush.msra.mxu0 %v141
    %185 = vmatpush.msra.mxu0 %v140
    %186 = vmatpush.msra.mxu0 %v139
    %187 = vmatpush.msra.mxu0 %v138
    %188 = vmatpush.msra.mxu0 %v137
    %189 = vmatmul.f32.gmra.mxu0 %v135
    %v190 = vpop.f32.mrf.mxu0
    %v191 = vadd.f32 %v171, %v190
    %192 = vdwg.mxu0
    %193 = vmatpush.msra.mxu0 %v168
    %194 = vmatpush.msra.mxu0 %v167
    %195 = vmatpush.msra.mxu0 %v166
    %196 = vmatpush.msra.mxu0 %v165
    %197 = vmatpush.msra.mxu0 %v164
    %198 = vmatpush.msra.mxu0 %v163
    %199 = vmatpush.msra.mxu0 %v162
    %200 = vmatpush.msra.mxu0 %v161
    %201 = vmatpush.msra.mxu0 %v160
    %202 = vmatpush.msra.mxu0 %v159
    %203 = vmatpush.msra.mxu0 %v158
    %204 = vmatpush.msra.mxu0 %v157
    %205 = vmatpush.msra.mxu0 %v156
    %206 = vmatpush.msra.mxu0 %v155
    %207 = vmatpush.msra.mxu0 %v154
    %208 = vmatpush.msra.mxu0 %v153
    %209 = vmatmul.f32.gmra.mxu0 %v136
    %v210 = vpop.f32.mrf.mxu0
    %v211 = vadd.f32 %v191, %v210
    %212 = vdwg.mxu0
    %213 = vst [vmem:[#allocation10] sm:$0xff] %v211
    // Predicated region
    $region38: #{tpu_custom_call.1} parent=1 // pred_check
      _
    $region39: #{tpu_custom_call.1} parent=1 // pred_check_branch
      %215 = sbr.rel (0) target = $region41
    $region40: #{tpu_custom_call.1} parent=1 // pred_region
      %217 = vsyncadd [#allocation4], 0
      %s219 = sshll.u32 [#allocation10], 4
      %s220 = int_to_ptr.vmem [resolvable:$true] %s219
      %s221 = sshll.u32 %s5, 4
      %s222 = int_to_ptr.hbm [resolvable:$true] %s221
      %224 = dma.vmem_to_hbm [thread:$0]  %s220, 128, %s222, [#allocation4]
    $region41: #{tpu_custom_call.1} parent=1 // pred_fallthru
      _
    // Predicated region
    $region42: #{tpu_custom_call.1} parent=1 // pred_check
      _
    $region43: #{tpu_custom_call.1} parent=1 // pred_check_branch
      %226 = sbr.rel (0) target = $region45
    $region44: #{tpu_custom_call.1} parent=1 // pred_region
      %228 = dma.done [#allocation4], 128
    $region45: #{tpu_custom_call.1} parent=1 // pred_fallthru
      _
    %229 = vsyncpa [#allocation3], 1
    %230 = vsyncpa [#allocation6], 1
    %231 = vsyncpa [#allocation9], 1
    %232 = vsyncpa [#allocation4], 1

</llo_original>
